<compile_context>
chip_gen: v5e
topology: v5e:2x2
jax: 0.10.0
libtpu: 0.0.40
codegen_flags: <defaults>
</compile_context>

<pallas_src>
import numpy as np
import jax
import jax.numpy as jnp
from jax import lax
from jax.experimental import pallas as pl
from jax.experimental.pallas import tpu as pltpu

NEG = -1.0e9          # finite "-inf" so 0 * NEG == 0 (no NaNs)
K_PAD = 128           # lane-dense tag dimension
VMEM_LIMIT = 32 * 1024 * 1024   # safe on all generations (v7x has 64 MiB physical)


def _time_unroll(T):
    """Full unroll only for toy T; bounded unroll at realistic BERT lengths."""
    return True if T <= 32 else 4


# ----------------------------------------------------------------------------
# Kernel 1: linear classification head  (hidden @ W + b) -> emissions/logits
# tiled over M = T*B rows, W/b resident, bf16 inputs, f32 accumulation
# ----------------------------------------------------------------------------
def linear_kernel(x_ref, w_ref, b_ref, o_ref):
    o_ref[...] = (
        jnp.dot(x_ref[...], w_ref[...], preferred_element_type=jnp.float32)
        + b_ref[...]
    )


def _row_tile(M):
    for tm in (1024, 512, 256, 128):
        if M % tm == 0:
            return tm
    return 8 if M % 8 == 0 else M


def compute_logits_time_major(input_ids, emb, w_cls_pad, b_cls_pad):
    """Stand-in for `pretrained(**inputs).logits`, emitted time-major (T, B, Kpad)."""
    # Embedding lookup on transposed ids: hidden is already time-major -> no transposes.
    hidden = jnp.take(emb, input_ids.T, axis=0).astype(jnp.bfloat16)   # (T, B, H)
    T, B, H = hidden.shape
    Kp = w_cls_pad.shape[1]
    M = T * B
    x2d = hidden.reshape(M, H)
    tm = _row_tile(M)

    out = pl.pallas_call(
        linear_kernel,
        out_shape=jax.ShapeDtypeStruct((M, Kp), jnp.float32),
        grid=(pl.cdiv(M, tm),),
        in_specs=[
            pl.BlockSpec((tm, H), lambda i: (i, 0)),      # x tile, pipelined
            pl.BlockSpec((H, Kp), lambda i: (0, 0)),      # W resident
            pl.BlockSpec((1, Kp), lambda i: (0, 0)),      # bias resident
        ],
        out_specs=pl.BlockSpec((tm, Kp), lambda i: (i, 0)),
        compiler_params=pltpu.CompilerParams(
            dimension_semantics=("parallel",),
            vmem_limit_bytes=VMEM_LIMIT,
        ),
    )(x2d, w_cls_pad.astype(jnp.bfloat16), b_cls_pad.reshape(1, Kp).astype(jnp.float32))
    return out.reshape(T, B, Kp)


# ----------------------------------------------------------------------------
# Kernel 2: CRF log-likelihood per example (torchcrf `crf(logits, tags, mask)`)
# refs per batch tile: e_ref (T,tb,Kp), tags_ref (T,tb,1) int32, mask_ref (T,tb,1) f32
# output: llh_ref (tb, 1)
# ----------------------------------------------------------------------------
def crf_llh_kernel(e_ref, tags_ref, mask_ref, trans_ref, start_ref, end_ref, llh_ref):
    T, B, K = e_ref.shape
    trans = trans_ref[...]                     # (K, K)
    exp_trans = jnp.exp(trans)                 # hoisted: NEG padding underflows to 0
    start = start_ref[...]                     # (1, K)
    end = end_ref[...]                         # (1, K)
    iota_k = lax.broadcasted_iota(jnp.int32, (B, K), 1)   # hoisted out of the loop

    e0 = e_ref[0]                                   # (B, K)
    alpha0 = start + e0                             # forward-algorithm state
    oh0 = (iota_k == tags_ref[0]).astype(jnp.float32)
    score0 = jnp.sum(alpha0 * oh0, axis=-1, keepdims=True)         # (B, 1)

    def body(t, carry):
        alpha, score, prev_oh = carry
        e_t = e_ref[t]              # (B, K)
        m_t = mask_ref[t]           # (B, 1) float {0,1}
        tag_t = tags_ref[t]         # (B, 1) int32

        # denominator: logsumexp over previous tag, as an exp-space matmul on the MXU
        #   logsumexp_p(alpha_p + trans_pc) = m + log( sum_p exp(alpha_p - m) * exp(trans_pc) )
        m = jnp.max(alpha, axis=-1, keepdims=True)                     # (B, 1)
        p = jnp.exp(alpha - m)                                         # (B, K) EUP exps
        s = jnp.dot(p, exp_trans, preferred_element_type=jnp.float32)  # (B, K) MXU
        nxt = e_t + m + jnp.log(s + 1e-30)     # +eps: padded columns stay finite
        alpha = jnp.where(m_t > 0, nxt, alpha)

        # numerator: gold-path score; transition gather as a one-hot matmul (MXU)
        cur_oh = (iota_k == tag_t).astype(jnp.float32)                # (B, K)
        tr = jnp.dot(prev_oh, trans, preferred_element_type=jnp.float32)  # (B, K)
        step = jnp.sum((tr + e_t) * cur_oh, axis=-1, keepdims=True)   # (B, 1)
        score = score + m_t * step
        prev_oh = jnp.where(m_t > 0, cur_oh, prev_oh)
        return alpha, score, prev_oh

    alpha, score, prev_oh = lax.fori_loop(1, T, body, (alpha0, score0, oh0),
                                          unroll=_time_unroll(T))

    score = score + jnp.sum(end * prev_oh, axis=-1, keepdims=True)
    xe = alpha + end
    mx = jnp.max(xe, axis=-1, keepdims=True)
    denom = jnp.log(jnp.sum(jnp.exp(xe - mx), axis=-1, keepdims=True)) + mx
    llh_ref[...] = score - denom                    # (B, 1) per-example log-likelihood


def _batch_block(B):
    # Prefer >=2 grid steps (megacore sharding on v7x) with a modest per-block VMEM
    # footprint (fits v7x's 64 MiB); otherwise take the whole batch.
    for tb in (16, 8):
        if B >= 2 * tb and B % tb == 0:
            return tb
    return B


def crf_neg_log_likelihood(emissions_tbk, tags, mask, trans_p, start_p, end_p):
    """-crf(logits, tags, mask, reduction='mean'); emissions already (T, B, Kpad)."""
    T, B, Kp = emissions_tbk.shape
    tags_tb1 = jnp.transpose(tags, (1, 0))[:, :, None].astype(jnp.int32)
    mask_tb1 = jnp.transpose(mask, (1, 0))[:, :, None].astype(jnp.float32)
    tb = _batch_block(B)
    llh = pl.pallas_call(
        crf_llh_kernel,
        out_shape=jax.ShapeDtypeStruct((B, 1), jnp.float32),
        grid=(pl.cdiv(B, tb),),
        in_specs=[
            pl.BlockSpec((T, tb, Kp), lambda i: (0, i, 0)),
            pl.BlockSpec((T, tb, 1), lambda i: (0, i, 0)),
            pl.BlockSpec((T, tb, 1), lambda i: (0, i, 0)),
            pl.BlockSpec((Kp, Kp), lambda i: (0, 0)),
            pl.BlockSpec((1, Kp), lambda i: (0, 0)),
            pl.BlockSpec((1, Kp), lambda i: (0, 0)),
        ],
        out_specs=pl.BlockSpec((tb, 1), lambda i: (i, 0)),
        compiler_params=pltpu.CompilerParams(
            dimension_semantics=("parallel",),
            vmem_limit_bytes=VMEM_LIMIT,
        ),
    )(emissions_tbk, tags_tb1, mask_tb1, trans_p,
      start_p.reshape(1, Kp), end_p.reshape(1, Kp))
    return -jnp.mean(llh)                           # reduction='mean', negated


# ----------------------------------------------------------------------------
# Kernel 3: Viterbi forward recursion (scores + backpointers) for crf.decode
# ----------------------------------------------------------------------------
def viterbi_fwd_kernel(e_ref, mask_ref, trans_ref, start_ref, end_ref,
                       score_ref, hist_ref):
    T, B, K = e_ref.shape
    trans = trans_ref[...]
    start = start_ref[...]
    end = end_ref[...]
    # previous-tag index, broadcast over the batch (no materialized (B,K,K) constant)
    iota_src = lax.broadcasted_iota(jnp.int32, (1, K, K), 1)

    hist_ref[0] = jnp.zeros((B, K), jnp.int32)      # history[0] unused
    score0 = start + e_ref[0]                       # (B, K)

    def body(t, score):
        e_t = e_ref[t]                              # (B, K)
        m_t = mask_ref[t]                           # (B, 1)
        # e_t is constant over the source-tag axis -> drop it from the broadcast/argmax
        x = score[:, :, None] + trans[None, :, :]   # (B, Kprev, Kcur)
        best = jnp.max(x, axis=1)                   # (B, Kcur)
        is_max = x >= best[:, None, :]
        idx = jnp.min(jnp.where(is_max, iota_src, K), axis=1).astype(jnp.int32)
        hist_ref[t] = idx                           # lane-dense backpointers
        nxt = best + e_t
        return jnp.where(m_t > 0, nxt, score)

    score = lax.fori_loop(1, T, body, score0, unroll=_time_unroll(T))
    score_ref[...] = score + end


def crf_viterbi_forward(emissions_tbk, mask, trans_p, start_p, end_p):
    T, B, Kp = emissions_tbk.shape
    mask_tb1 = jnp.transpose(mask, (1, 0))[:, :, None].astype(jnp.float32)
    tb = _batch_block(B)
    score, hist = pl.pallas_call(
        viterbi_fwd_kernel,
        out_shape=(jax.ShapeDtypeStruct((B, Kp), jnp.float32),
                   jax.ShapeDtypeStruct((T, B, Kp), jnp.int32)),
        grid=(pl.cdiv(B, tb),),
        in_specs=[
            pl.BlockSpec((T, tb, Kp), lambda i: (0, i, 0)),
            pl.BlockSpec((T, tb, 1), lambda i: (0, i, 0)),
            pl.BlockSpec((Kp, Kp), lambda i: (0, 0)),
            pl.BlockSpec((1, Kp), lambda i: (0, 0)),
            pl.BlockSpec((1, Kp), lambda i: (0, 0)),
        ],
        out_specs=(pl.BlockSpec((tb, Kp), lambda i: (i, 0)),
                   pl.BlockSpec((T, tb, Kp), lambda i: (0, i, 0))),
        compiler_params=pltpu.CompilerParams(
            dimension_semantics=("parallel",),
            vmem_limit_bytes=VMEM_LIMIT,
        ),
    )(emissions_tbk, mask_tb1, trans_p, start_p.reshape(1, Kp), end_p.reshape(1, Kp))
    return score, hist


def viterbi_backtrack_device(score, hist, mask):
    """Device-side backtrack (reverse lax.scan); returns a (B, T) int32 tag matrix."""
    T = hist.shape[0]
    last_tag = jnp.argmax(score, axis=-1).astype(jnp.int32)      # (B,)
    mask_i = mask.astype(jnp.int32)                              # (B, T)

    def step(cur_tag, t):
        out = cur_tag                                            # tag at position t
        bp = jnp.take_along_axis(hist[t], cur_tag[:, None], axis=-1)[:, 0]
        nxt = jnp.where(mask_i[:, t] > 0, bp, cur_tag)           # hold past seq end
        return nxt, out

    ts = jnp.arange(T - 1, -1, -1)
    _, tags_rev = lax.scan(step, last_tag, ts)                   # (T, B), reversed
    return tags_rev[::-1].T                                      # (B, T)


def tags_to_paths(tags, lengths):
    """Host glue: (B,T) tag matrix -> variable-length list of lists (torchcrf format)."""
    tags = np.asarray(tags)
    lengths = np.asarray(lengths)
    return [[int(t) for t in tags[b, :int(lengths[b])]] for b in range(tags.shape[0])]


# ----------------------------------------------------------------------------
# Parameter padding (tag dim K -> Kpad=128, -1e9 on transitions/start/end)
# ----------------------------------------------------------------------------
def pad_crf_params(params, K, Kp=K_PAD):
    H = params["w_cls"].shape[0]
    w_pad = jnp.zeros((H, Kp), jnp.float32).at[:, :K].set(params["w_cls"])
    b_pad = jnp.zeros((Kp,), jnp.float32).at[:K].set(params["b_cls"])
    start_pad = jnp.full((Kp,), NEG, jnp.float32).at[:K].set(params["start"])
    end_pad = jnp.full((Kp,), NEG, jnp.float32).at[:K].set(params["end"])
    trans_pad = jnp.full((Kp, Kp), NEG, jnp.float32).at[:K, :K].set(params["trans"])
    return dict(params, w_cls_pad=w_pad, b_cls_pad=b_pad,
                start_pad=start_pad, end_pad=end_pad, trans_pad=trans_pad)


# ----------------------------------------------------------------------------
# Model.forward equivalent
# ----------------------------------------------------------------------------
def model_forward(params, input_ids, attention_mask, labels=None):
    emissions = compute_logits_time_major(
        input_ids, params["emb"], params["w_cls_pad"], params["b_cls_pad"])   # (T,B,Kp)
    score, hist = crf_viterbi_forward(emissions, attention_mask,
                                      params["trans_pad"], params["start_pad"],
                                      params["end_pad"])
    tags = viterbi_backtrack_device(score, hist, attention_mask)              # (B, T)
    loss = None
    if labels is not None:
        loss = crf_neg_log_likelihood(emissions, labels, attention_mask,
                                      params["trans_pad"], params["start_pad"],
                                      params["end_pad"])
    lengths = jnp.sum(attention_mask.astype(jnp.int32), axis=1)
    pred = tags_to_paths(tags, lengths)            # small (B,T) host transfer only
    return pred, loss


if __name__ == "__main__":
    B, T, H, K, V = 2, 8, 32, 8, 64          # batch, seq, hidden, num_tags, vocab

    key = jax.random.PRNGKey(0)
    k1, k2, k3, k4, k5, k6, k7 = jax.random.split(key, 7)
    params = {
        "emb":   0.02 * jax.random.normal(k1, (V, H), jnp.float32),
        "w_cls": 0.02 * jax.random.normal(k2, (H, K), jnp.float32),
        "b_cls": jnp.zeros((K,), jnp.float32),
        # torchcrf init: uniform(-0.1, 0.1)
        "start": jax.random.uniform(k3, (K,), jnp.float32, -0.1, 0.1),
        "end":   jax.random.uniform(k4, (K,), jnp.float32, -0.1, 0.1),
        "trans": jax.random.uniform(k5, (K, K), jnp.float32, -0.1, 0.1),
    }
    params = pad_crf_params(params, K)

    input_ids = jax.random.randint(k6, (B, T), 0, V, dtype=jnp.int32)
    attention_mask = jnp.array([[1, 1, 1, 1, 1, 1, 1, 1],
                                [1, 1, 1, 1, 1, 1, 0, 0]], dtype=jnp.int32)
    labels = jax.random.randint(k7, (B, T), 0, K, dtype=jnp.int32) * attention_mask

    pred, loss = model_forward(params, input_ids, attention_mask, labels)
    loss = jax.block_until_ready(loss)

    assert np.isfinite(float(loss))
    assert len(pred) == B and len(pred[0]) == 8 and len(pred[1]) == 6
    assert all(0 <= t < K for path in pred for t in path)   # padded tags never decoded
    print("KERNEL_OK")
</pallas_src>

<mosaic_0001>
module attributes {stable_mosaic.version = 11 : i64} {
  func.func @linear_kernel(%arg0: i32, %arg1: memref<8x32xbf16, #tpu.memory_space<vmem>>, %arg2: memref<32x128xbf16, #tpu.memory_space<vmem>>, %arg3: memref<1x128xf32, #tpu.memory_space<vmem>>, %arg4: memref<8x128xf32, #tpu.memory_space<vmem>>) attributes {dimension_semantics = [#tpu.dimension_semantics<parallel>], iteration_bounds = array<i64: 2>, scalar_prefetch = 0 : i64, scratch_operands = 0 : i64, tpu.core_type = #tpu.core_type<tc>, window_params = [{transform_indices = @transform_0, window_bounds = array<i64: 8, 32>}, {pipeline_mode = #tpu.pipeline_mode<synchronous>, transform_indices = @transform_1, window_bounds = array<i64: 32, 128>}, {pipeline_mode = #tpu.pipeline_mode<synchronous>, transform_indices = @transform_2, window_bounds = array<i64: 1, 128>}, {transform_indices = @transform_3, window_bounds = array<i64: 8, 128>}]} {
    %c0 = arith.constant 0 : index
    %c0_0 = arith.constant 0 : index
    %0 = vector.load %arg1[%c0, %c0_0] : memref<8x32xbf16, #tpu.memory_space<vmem>>, vector<8x32xbf16>
    %c0_1 = arith.constant 0 : index
    %c0_2 = arith.constant 0 : index
    %1 = vector.load %arg2[%c0_1, %c0_2] : memref<32x128xbf16, #tpu.memory_space<vmem>>, vector<32x128xbf16>
    %cst = arith.constant dense<0.000000e+00> : vector<8x128xf32>
    %2 = tpu.matmul %0, %1, %cst {dimension_numbers = #tpu.dot_dimension_numbers<[1], [0], [0], [1], [0, 0, 1, 1], [], []>} : vector<8x32xbf16>, vector<32x128xbf16>, vector<8x128xf32> -> vector<8x128xf32>
    %c0_3 = arith.constant 0 : index
    %c0_4 = arith.constant 0 : index
    %3 = vector.load %arg3[%c0_3, %c0_4] : memref<1x128xf32, #tpu.memory_space<vmem>>, vector<1x128xf32>
    %4 = vector.broadcast %3 : vector<1x128xf32> to vector<8x128xf32>
    %5 = arith.addf %2, %4 : vector<8x128xf32>
    %c0_5 = arith.constant 0 : index
    %c0_6 = arith.constant 0 : index
    %6 = vector.load %arg4[%c0_5, %c0_6] : memref<8x128xf32, #tpu.memory_space<vmem>>, vector<8x128xf32>
    tpu.vector_store %arg4[%c0_5, %c0_6], %5 {strides = array<i32>} : memref<8x128xf32, #tpu.memory_space<vmem>>, vector<8x128xf32>,
    return
  }
  func.func @transform_0(%arg0: i32) -> (i32, i32) {
    %c0_i32 = arith.constant 0 : i32
    %c0_i32_0 = arith.constant 0 : i32
    return %arg0, %c0_i32 : i32, i32
  }
  func.func @transform_1(%arg0: i32) -> (i32, i32) {
    %c0_i32 = arith.constant 0 : i32
    %c0_i32_0 = arith.constant 0 : i32
    %c0_i32_1 = arith.constant 0 : i32
    return %c0_i32, %c0_i32_0 : i32, i32
  }
  func.func @transform_2(%arg0: i32) -> (i32, i32) {
    %c0_i32 = arith.constant 0 : i32
    %c0_i32_0 = arith.constant 0 : i32
    %c0_i32_1 = arith.constant 0 : i32
    return %c0_i32, %c0_i32_0 : i32, i32
  }
  func.func @transform_3(%arg0: i32) -> (i32, i32) {
    %c0_i32 = arith.constant 0 : i32
    %c0_i32_0 = arith.constant 0 : i32
    return %arg0, %c0_i32 : i32, i32
  }
}

</mosaic_0001>

<llo_original>
// kernel: tpu_custom_call.1
$region0: #{tpu_custom_call.1}
  #allocation0 [shape = 'u32[]', space=smem, size = 0x4, offset = 0x4, fixed_abs, tag = 'smem constant byte address 0x4 - core index']
  #allocation1 [shape = 'u32[72,128]{1,0:T(1,128)}', space=vmem, size = 0x9000, scoped, tag = 'internal scratch']
  %s0 = inlined_call_operand.hbm [shape: bf16[16,32], index: 0, kind: input, shape index: {}]
  %s1 = inlined_call_operand.hbm [shape: bf16[32,128], index: 1, kind: input, shape index: {}]
  %s2 = inlined_call_operand.vmem [shape: f32[1,128], index: 2, kind: input, shape index: {}]
  %s3 = inlined_call_operand.hbm [shape: f32[16,128], index: 3, kind: output, shape index: {}]
  %s4 = sld [smem:[#allocation0]]
  $region53: #{tpu_custom_call.1} parent=0
    _
  %s6 = ssub.s32 1, %s4
  %s7 = scalar_select 0, %s6, %s4
  $region1: #{tpu_custom_call.1} parent=0
    #allocation2 [shape = 'u8[4096]{0}', space=vmem, size = 0x1000, scoped, tag = 'input window, operand 0']
    #allocation3 [shape = 's32[2]{0}', space=sflag, size = 0x8, scoped, tag = 'scoped memory for tpu_custom_call.1']
    #allocation4 [shape = 's32[2]{0}', space=sflag, size = 0x8, scoped, tag = 'scoped memory for tpu_custom_call.1']
    #allocation5 [shape = 'u8[8192]{0}', space=vmem, size = 0x2000, scoped, tag = 'input window, operand 1, single buffered']
    #allocation6 [shape = 's32[1]{0}', space=sflag, size = 0x4, scoped, tag = 'scoped memory for tpu_custom_call.1']
    #allocation7 [shape = 'u8[8192]{0}', space=vmem, size = 0x2000, scoped, tag = 'output window, operand 0']
    %8 = vsyncpa [#allocation3], 0
    %s9 = scalar_lea.sflag [#allocation3], 1
    %10 = vsyncpa %s9, 0
    %11 = vsyncpa [#allocation6], 0
    %12 = vsyncpa [#allocation4], 0
    %s13 = scalar_lea.sflag [#allocation4], 1
    %14 = vsyncpa %s13, 0
    loop: start=0, step=1, limit=4
    $region2: #{tpu_custom_call.1} parent=1 // loop_pre_header
      _
    $region3: #{tpu_custom_call.1} parent=1 // loop_header
      %s16 = sphi 0, %s20
      %p17 = scmp.ge.s32.totalorder %s16, 4
      %s26 = sphi 0, %s28
      %s29 = sphi 0, %s26
      %s30 = sphi 0, %s29
      %s46 = sphi 0, %s30
      %s50 = sphi 0, %s50
      %s52 = sphi 0, %s50
      %s53 = sphi 0, %s52
      %s67 = sphi 0, %s53
      %s71 = sphi 0, %s71
      %s73 = sphi 0, %s71
      %s74 = sphi 0, %s73
      %s88 = sphi 0, %s74
      %s94 = sphi 0, %s96
      %s97 = sphi 0, %s94
      %s98 = sphi 0, %s97
      %s114 = sphi 0, %s98
    $region4: #{tpu_custom_call.1} parent=1 // loop_header_branch
      %19 = sbr.rel (%p17) target = $region8
    $region5: #{tpu_custom_call.1} parent=1 // loop_body
      %s21 = ssub.s32 %s16, 1
      %s22 = ssub.s32 %s16, 2
      %s23 = sadd.s32 %s16, 1
      %s24 = ssub.s32 %s16, %s23
      %p25 = scmp.eq.s32.totalorder %s24, 0
      %s27 = sadd.s32 %s26, 1
      %s28 = scalar_select %p25, %s26, %s27
      %p31 = pneg %p25
      %p32 = scmp.eq.s32.totalorder %s16, 1
      %p33 = por %p31, %p32
      %p34 = scmp.ne.s32.totalorder %s26, %s29
      %p35 = scmp.eq.s32.totalorder %s16, 0
      %p36 = por %p34, %p35
      %p37 = scmp.ne.s32.totalorder %s26, %s29
      %p38 = scmp.eq.s32.totalorder %s21, 1
      %p39 = por %p37, %p38
      %p40 = scmp.ne.s32.totalorder %s29, %s30
      %p41 = scmp.eq.s32.totalorder %s21, 0
      %p42 = por %p40, %p41
      %p43 = scmp.ne.s32.totalorder %s29, %s30
      %p44 = scmp.eq.s32.totalorder %s22, 1
      %p45 = por %p43, %p44
      %p47 = scmp.ne.s32.totalorder %s30, %s46
      %p48 = scmp.eq.s32.totalorder %s22, 0
      %p49 = por %p47, %p48
      %s51 = sadd.s32 %s50, 1
      %p54 = scmp.eq.s32.totalorder %s16, 1
      %p55 = scmp.ne.s32.totalorder %s50, %s52
      %p56 = scmp.eq.s32.totalorder %s16, 0
      %p57 = por %p55, %p56
      %p58 = scmp.ne.s32.totalorder %s50, %s52
      %p59 = scmp.eq.s32.totalorder %s21, 1
      %p60 = por %p58, %p59
      %p61 = scmp.ne.s32.totalorder %s52, %s53
      %p62 = scmp.eq.s32.totalorder %s21, 0
      %p63 = por %p61, %p62
      %p64 = scmp.ne.s32.totalorder %s52, %s53
      %p65 = scmp.eq.s32.totalorder %s22, 1
      %p66 = por %p64, %p65
      %p68 = scmp.ne.s32.totalorder %s53, %s67
      %p69 = scmp.eq.s32.totalorder %s22, 0
      %p70 = por %p68, %p69
      %s72 = sadd.s32 %s71, 1
      %p75 = scmp.eq.s32.totalorder %s16, 1
      %p76 = scmp.ne.s32.totalorder %s71, %s73
      %p77 = scmp.eq.s32.totalorder %s16, 0
      %p78 = por %p76, %p77
      %p79 = scmp.ne.s32.totalorder %s71, %s73
      %p80 = scmp.eq.s32.totalorder %s21, 1
      %p81 = por %p79, %p80
      %p82 = scmp.ne.s32.totalorder %s73, %s74
      %p83 = scmp.eq.s32.totalorder %s21, 0
      %p84 = por %p82, %p83
      %p85 = scmp.ne.s32.totalorder %s73, %s74
      %p86 = scmp.eq.s32.totalorder %s22, 1
      %p87 = por %p85, %p86
      %p89 = scmp.ne.s32.totalorder %s74, %s88
      %p90 = scmp.eq.s32.totalorder %s22, 0
      %p91 = por %p89, %p90
      %s92 = ssub.s32 %s16, %s23
      %p93 = scmp.eq.s32.totalorder %s92, 0
      %s95 = sadd.s32 %s94, 1
      %s96 = scalar_select %p93, %s94, %s95
      %p99 = pneg %p93
      %p100 = scmp.eq.s32.totalorder %s16, 1
      %p101 = por %p99, %p100
      %p102 = scmp.ne.s32.totalorder %s94, %s97
      %p103 = scmp.eq.s32.totalorder %s16, 0
      %p104 = por %p102, %p103
      %p105 = scmp.ne.s32.totalorder %s94, %s97
      %p106 = scmp.eq.s32.totalorder %s21, 1
      %p107 = por %p105, %p106
      %p108 = scmp.ne.s32.totalorder %s97, %s98
      %p109 = scmp.eq.s32.totalorder %s21, 0
      %p110 = por %p108, %p109
      %p111 = scmp.ne.s32.totalorder %s97, %s98
      %p112 = scmp.eq.s32.totalorder %s22, 1
      %p113 = por %p111, %p112
      %p115 = scmp.ne.s32.totalorder %s98, %s114
      %p116 = scmp.eq.s32.totalorder %s22, 0
      %p117 = por %p115, %p116
      %p118 = scmp.le.s32.totalorder 1, %s16
      %p119 = scmp.lt.s32.totalorder %s16, 3
      %p120 = pnand %p118, %p119
      %p121 = pneg %p120
      // Predicated region
      $region9: #{tpu_custom_call.1} parent=5 // pred_check
        _
      $region10: #{tpu_custom_call.1} parent=5 // pred_check_branch
        %123 = sbr.rel (%p120) target = $region12
      $region11: #{tpu_custom_call.1} parent=5 // pred_region
        %s124 = ssub.s32 %s16, 1
        // Predicated region
        $region13: #{tpu_custom_call.1} parent=11 // pred_check
          %p125 = pneg %p63
        $region14: #{tpu_custom_call.1} parent=11 // pred_check_branch
          %127 = sbr.rel (%p125) target = $region16
        $region15: #{tpu_custom_call.1} parent=11 // pred_region
          %129 = vsyncadd [#allocation6], 0
          %s130 = sshll.u32 %s1, 4
          %s131 = int_to_ptr.hbm [resolvable:$true] %s130
          %s132 = sshll.u32 [#allocation5], 4
          %s133 = int_to_ptr.vmem [resolvable:$true] %s132
          %138 = dma.hbm_to_vmem [thread:$0]  %s131, 256, %s133, [#allocation6], 64, 64, 4
        $region16: #{tpu_custom_call.1} parent=11 // pred_fallthru
          _
        // Predicated region
        $region17: #{tpu_custom_call.1} parent=11 // pred_check
          %p139 = pneg %p84
        $region18: #{tpu_custom_call.1} parent=11 // pred_check_branch
          %141 = sbr.rel (%p139) target = $region20
        $region19: #{tpu_custom_call.1} parent=11 // pred_region
          _
        $region20: #{tpu_custom_call.1} parent=11 // pred_fallthru
          _
      $region12: #{tpu_custom_call.1} parent=5 // pred_fallthru
        _
      %p142 = scmp.lt.s32.totalorder %s16, 2
      // Predicated region
      $region21: #{tpu_custom_call.1} parent=5 // pred_check
        %p143 = pneg %p142
      $region22: #{tpu_custom_call.1} parent=5 // pred_check_branch
        %145 = sbr.rel (%p143) target = $region24
      $region23: #{tpu_custom_call.1} parent=5 // pred_region
        // Predicated region
        $region25: #{tpu_custom_call.1} parent=23 // pred_check
          %p146 = pneg %p36
        $region26: #{tpu_custom_call.1} parent=23 // pred_check_branch
          %148 = sbr.rel (%p146) target = $region28
        $region27: #{tpu_custom_call.1} parent=23 // pred_region
          %s149 = sand.u32 %s26, 1
          %s150 = scalar_lea.sflag [#allocation3], %s149
          %s151 = sand.u32 %s26, 1
          %s152 = smul.addr %s151, 4
          %s153 = scalar_lea.vmem [#allocation2], %s152
          %155 = vsyncadd %s150, 0
          %s156 = smul.addr %s16, 4
          %s157 = scalar_lea.hbm %s0, %s156
          %s159 = sshll.u32 %s157, 4
          %s160 = int_to_ptr.hbm [resolvable:$true] %s159
          %s161 = sshll.u32 %s153, 4
          %s162 = int_to_ptr.vmem [resolvable:$true] %s161
          %164 = dma.hbm_to_vmem [thread:$0]  %s160, 64, %s162, %s150
        $region28: #{tpu_custom_call.1} parent=23 // pred_fallthru
          _
      $region24: #{tpu_custom_call.1} parent=5 // pred_fallthru
        _
      %p165 = scmp.le.s32.totalorder 1, %s16
      %p166 = scmp.lt.s32.totalorder %s16, 3
      %p167 = pnand %p165, %p166
      %p168 = pneg %p167
      // Predicated region
      $region29: #{tpu_custom_call.1} parent=5 // pred_check
        _
      $region30: #{tpu_custom_call.1} parent=5 // pred_check_branch
        %170 = sbr.rel (%p167) target = $region32
      $region31: #{tpu_custom_call.1} parent=5 // pred_region
        %s171 = ssub.s32 %s16, 1
        %s172 = sand.u32 %s29, 1
        %s173 = scalar_lea.sflag [#allocation3], %s172
        %s174 = sand.u32 %s29, 1
        %s175 = smul.addr %s174, 4
        %s176 = scalar_lea.vmem [#allocation2], %s175
        // Predicated region
        $region33: #{tpu_custom_call.1} parent=31 // pred_check
          %p177 = pneg %p42
        $region34: #{tpu_custom_call.1} parent=31 // pred_check_branch
          %179 = sbr.rel (%p177) target = $region36
        $region35: #{tpu_custom_call.1} parent=31 // pred_region
          %181 = dma.done %s173, 64
        $region36: #{tpu_custom_call.1} parent=31 // pred_fallthru
          _
        // Predicated region
        $region37: #{tpu_custom_call.1} parent=31 // pred_check
          %p182 = pneg %p63
        $region38: #{tpu_custom_call.1} parent=31 // pred_check_branch
          %184 = sbr.rel (%p182) target = $region40
        $region39: #{tpu_custom_call.1} parent=31 // pred_region
          %186 = dma.done [#allocation6], 256
        $region40: #{tpu_custom_call.1} parent=31 // pred_fallthru
          _
        %s187 = sand.u32 %s29, 1
        %s188 = scalar_lea.sflag [#allocation3], %s187
        %s189 = sand.u32 %s29, 1
        %s190 = smul.addr %s189, 4
        %s191 = scalar_lea.vmem [#allocation2], %s190
        %p192 = pneg %p42
        %p193 = pneg %p39
        %p194 = pneg %p63
        %p195 = pneg %p60
        %p196 = pneg %p84
        %p197 = pneg %p81
        %p198 = pneg %p110
        %p199 = pneg %p107
        %s200 = sand.u32 %s97, 1
        %s201 = scalar_lea.sflag [#allocation4], %s200
        %s202 = sand.u32 %s97, 1
        %s203 = smul.addr %s202, 8
        %s204 = scalar_lea.vmem [#allocation7], %s203
        %v206 = vld [vmem:[%s176] sm:$0xf]
        %v207 = vld [vmem:[#allocation5] sm:$0xf]
        %v208 = vld [vmem:[#allocation5 + $0x4] sm:$0xf]
        %v209 = vld [vmem:[#allocation5 + $0x8] sm:$0xf]
        %v210 = vld [vmem:[#allocation5 + $0xc] sm:$0xf]
        %v211 = vld [vmem:[%s2] sm:$0x1]
        %v213 = vperm.slane %v211, 0
        %v219 = vunpack.c.l.b16 %v207
        %v220 = vunpack.c.l.b16 %v208
        %v221 = vunpack.c.l.b16 %v209
        %v222 = vunpack.c.l.b16 %v210
        %v223 = vpack.c.b16 %v220, %v219
        %v224 = vpack.c.b16 %v222, %v221
        %vm227 = vcmask 261120
        %v229 = vsel %vm227, %v206, 0
        %231 = vmatpush.bf16.msra.mxu0 0
        %232 = vmatpush.bf16.msra.mxu0 0
        %233 = vmatpush.bf16.msra.mxu0 0
        %234 = vmatpush.bf16.msra.mxu0 0
        %235 = vmatpush.bf16.msra.mxu0 0
        %236 = vmatpush.bf16.msra.mxu0 0
        %237 = vmatpush.bf16.msra.mxu0 %v224
        %238 = vmatpush.bf16.msra.mxu0 %v223
        %239 = vmatmul.bf16.gmra.mxu0 %v229
        %v240 = vpop.f32.mrf.mxu0
        %v241 = vadd.f32 %v213, %v240
        %v242 = vpop.f32.mrf.mxu0
        %243 = vdwg.mxu0
        %244 = vst [vmem:[%s204] sm:$0xff] %v241
        %s245 = sand.u32 %s97, 1
        %s246 = scalar_lea.sflag [#allocation4], %s245
        %s247 = sand.u32 %s97, 1
        %s248 = smul.addr %s247, 8
        %s249 = scalar_lea.vmem [#allocation7], %s248
        // Predicated region
        $region41: #{tpu_custom_call.1} parent=31 // pred_check
          %p250 = pneg %p107
        $region42: #{tpu_custom_call.1} parent=31 // pred_check_branch
          %252 = sbr.rel (%p250) target = $region44
        $region43: #{tpu_custom_call.1} parent=31 // pred_region
          %254 = vsyncadd %s246, 0
          %s255 = smul.addr %s21, 8
          %s256 = scalar_lea.hbm %s3, %s255
          %s258 = sshll.u32 %s249, 4
          %s259 = int_to_ptr.vmem [resolvable:$true] %s258
          %s260 = sshll.u32 %s256, 4
          %s261 = int_to_ptr.hbm [resolvable:$true] %s260
          %263 = dma.vmem_to_hbm [thread:$0]  %s259, 128, %s261, %s246
        $region44: #{tpu_custom_call.1} parent=31 // pred_fallthru
          _
      $region32: #{tpu_custom_call.1} parent=5 // pred_fallthru
        _
      %p264 = scmp.le.s32.totalorder 2, %s16
      // Predicated region
      $region45: #{tpu_custom_call.1} parent=5 // pred_check
        %p265 = pneg %p264
      $region46: #{tpu_custom_call.1} parent=5 // pred_check_branch
        %267 = sbr.rel (%p265) target = $region48
      $region47: #{tpu_custom_call.1} parent=5 // pred_region
        %s268 = ssub.s32 %s16, 2
        // Predicated region
        $region49: #{tpu_custom_call.1} parent=47 // pred_check
          %p269 = pneg %p113
        $region50: #{tpu_custom_call.1} parent=47 // pred_check_branch
          %271 = sbr.rel (%p269) target = $region52
        $region51: #{tpu_custom_call.1} parent=47 // pred_region
          %s272 = sand.u32 %s98, 1
          %s273 = scalar_lea.sflag [#allocation4], %s272
          %s274 = sand.u32 %s98, 1
          %s275 = smul.addr %s274, 8
          %s276 = scalar_lea.vmem [#allocation7], %s275
          %278 = dma.done %s273, 128
        $region52: #{tpu_custom_call.1} parent=47 // pred_fallthru
          _
      $region48: #{tpu_custom_call.1} parent=5 // pred_fallthru
        _
    $region6: #{tpu_custom_call.1} parent=1 // loop_footer
      %s20 = sadd.s32 1, %s16
    $region7: #{tpu_custom_call.1} parent=1 // loop_footer_branch
      %15 = sbr.rel target = $region3
    $region8: #{tpu_custom_call.1} parent=1 // loop_exit
      _
    %279 = vsyncpa [#allocation3], 1
    %s280 = scalar_lea.sflag [#allocation3], 1
    %281 = vsyncpa %s280, 1
    %282 = vsyncpa [#allocation6], 1
    %283 = vsyncpa [#allocation4], 1
    %s284 = scalar_lea.sflag [#allocation4], 1
    %285 = vsyncpa %s284, 1

</llo_original>
